<compile_context>
chip_gen: v5e
topology: v5e:2x2
jax: 0.10.0
libtpu: 0.0.40
codegen_flags: <defaults>
</compile_context>

<pallas_src>
import jax
import jax.numpy as jnp
from jax.experimental import pallas as pl
from jax.experimental.pallas import tpu as pltpu


def _tofp32_kernel(x_ref, o_ref):
    # Elementwise cast of the whole VMEM tile to float32 (VPU only).
    o_ref[...] = x_ref[...].astype(jnp.float32)


def _align_down(v, a):
    return (v // a) * a


def _chip_budgets():
    """Return (target f32-output bytes per tile, explicit vmem limit)."""
    try:
        vmem = int(getattr(pltpu.get_tpu_info(), "vmem_capacity_bytes", 0))
    except Exception:
        vmem = 0
    if vmem and vmem <= (32 << 20):
        # Very small-VMEM parts / emulators: stay inside the reported cap.
        return 2 << 20, min(vmem, 16 << 20)
    if vmem and (48 << 20) <= vmem <= (64 << 20):
        # v7x-class: 64 MiB physical VMEM but 3.2 TB/s HBM -> bigger tiles to
        # amortize the ~0.35us fixed per-step cost; 48 MiB stays under physical.
        return 8 << 20, 48 << 20
    # v5e/v6e (128 MiB physical) or unknown: 4 MiB output tiles already sit in
    # the 85%+ of HBM-roofline regime; 32 MiB limit is safe everywhere.
    return 4 << 20, 32 << 20


def _choose_lane_width(total, max_lane=8192):
    """Largest multiple of 128 dividing `total` (<= max_lane), capped so the
    row count R = total // L keeps enough rows for a multi-step grid."""
    upper = min(max_lane, total)
    for min_rows in (128, 8):
        if total >= min_rows * 128:
            upper = min(upper, total // min_rows)
            break
    upper = _align_down(upper, 128)
    best = None
    c = 128
    while c <= upper:
        if total % c == 0:
            best = c
        c += 128
    if best is None and total % 128 == 0:
        best = 128
    return best


def _choose_tile_rows(R, L, src_bytes, target_out_bytes, vmem_limit):
    """Byte-budget row tile: ~target_out_bytes of f32 output per grid step,
    >=4 grid steps when the row count allows it, 32-row aligned, and clamped
    so double-buffered in+out fits under the explicit VMEM limit."""
    if R < 32:
        return R                         # block == full array dim (always legal)
    per_row_bytes = 2 * L * (src_bytes + 4)          # double-buffered in + out
    tr_vmem = _align_down(max((vmem_limit - (2 << 20)) // per_row_bytes, 8), 8)
    tr_vmem = max(tr_vmem, 8)
    tr_budget = max(_align_down(target_out_bytes // (4 * L), 32), 32)
    tr_steps = max(_align_down(R // 4, 8), 8)        # >= ~4 pipelined steps
    return max(min(tr_budget, tr_steps, tr_vmem, R), 8)


def _cast_2d(x2, tr, L, src_bytes, vmem_limit, use_core_parallel, input_buffers):
    R = x2.shape[0]
    grid = (pl.cdiv(R, tr),)
    row_sem = pltpu.CORE_PARALLEL if use_core_parallel else "parallel"
    in_spec_kwargs = {}
    if input_buffers != 2:
        # Optional deeper input pipelining (sweep; keep only if positive).
        in_spec_kwargs = dict(pipeline_mode=pl.Buffered(input_buffers))
    cost = pl.CostEstimate(
        flops=0,
        transcendentals=0,
        bytes_accessed=R * L * (src_bytes + 4),
    )
    return pl.pallas_call(
        _tofp32_kernel,
        out_shape=jax.ShapeDtypeStruct((R, L), jnp.float32),
        grid_spec=pltpu.PrefetchScalarGridSpec(
            num_scalar_prefetch=0,
            grid=grid,
            # Full-row lane-dense tiles: one contiguous HBM stride per DMA,
            # unmasked full-width vst on the output.
            in_specs=[pl.BlockSpec((tr, L), lambda i: (i, 0), **in_spec_kwargs)],
            out_specs=pl.BlockSpec((tr, L), lambda i: (i, 0)),
        ),
        compiler_params=pltpu.CompilerParams(
            dimension_semantics=(row_sem,),
            vmem_limit_bytes=vmem_limit,
        ),
        cost_estimate=cost,
    )(x2)


def tofp32(x, *, small_threshold=32768, force_pallas=False,
           use_core_parallel=False, input_buffers=2):
    """Equivalent of torch.Tensor.float(): cast any real dtype to float32."""
    x = jnp.asarray(x)
    orig_shape = x.shape

    # No-op fast path: already float32.
    if x.dtype == jnp.float32:
        return x
    if jnp.issubdtype(x.dtype, jnp.complexfloating):
        # torch .float() on complex keeps the real part (with a warning).
        return x.real.astype(jnp.float32)

    total = int(x.size)
    if total == 0:
        return x.astype(jnp.float32)

    # Tiny inputs: launch + DMA setup loses to the fused XLA convert.
    if not force_pallas and total < small_threshold:
        return x.astype(jnp.float32)

    src_bytes = jnp.dtype(x.dtype).itemsize
    target_out_bytes, vmem_limit = _chip_budgets()

    last = orig_shape[-1] if len(orig_shape) else 1
    lane_dense = last >= 128 and last % 128 == 0

    if lane_dense:
        # Collapse leading dims only: keeps the last (lane) dim intact, so the
        # reshape lowers to a bitcast instead of a physical relayout copy.
        L = last
        R = total // L
        # Guard: even an 8-row double-buffered tile must fit the VMEM limit.
        if 2 * (src_bytes + 4) * L * 8 > vmem_limit - (2 << 20):
            return x.astype(jnp.float32)
        x2 = x.reshape(R, L)
        tr = _choose_tile_rows(R, L, src_bytes, target_out_bytes, vmem_limit)
        out2 = _cast_2d(x2, tr, L, src_bytes, vmem_limit,
                        use_core_parallel, input_buffers)
        return out2.reshape(orig_shape)

    # Lane-sparse last dim (e.g. NCHW with W=16): flattening to a lane-dense
    # (R, L) slab gives unmasked stores in-kernel, but the flatten itself may
    # lower to a de-pad/re-pad relayout copy of the tiled HBM layout (a full
    # extra HBM round trip each way).  XLA's fused convert is near roofline
    # for these shapes, so only take the Pallas path when explicitly forced.
    if not force_pallas:
        return x.astype(jnp.float32)

    L = _choose_lane_width(total)
    if L is None:
        # TODO(synk): ragged totals not divisible by 128 — fall back to the
        # fused XLA convert instead of padding inside the kernel.
        return x.astype(jnp.float32)
    R = total // L
    x2 = x.reshape(R, L)
    tr = _choose_tile_rows(R, L, src_bytes, target_out_bytes, vmem_limit)
    out2 = _cast_2d(x2, tr, L, src_bytes, vmem_limit,
                    use_core_parallel, input_buffers)
    return out2.reshape(orig_shape)


if __name__ == "__main__":
    k1, k2, k3 = jax.random.split(jax.random.PRNGKey(0), 3)

    # 1) Small NCHW-shaped bf16 input (typical use of this module).  Its last
    #    dim (16) is lane-sparse, so the default dispatch would use the fused
    #    XLA convert; force the Pallas flatten path to exercise the kernel.
    x_small = jax.random.normal(k1, (2, 4, 16, 16), dtype=jnp.bfloat16)
    y_small = jax.block_until_ready(tofp32(x_small, force_pallas=True))
    assert y_small.dtype == jnp.float32
    assert y_small.shape == x_small.shape
    assert bool(jnp.all(y_small == x_small.astype(jnp.float32)))  # bf16->f32 exact

    # 2) Lane-dense bf16 input above the dispatch threshold: collapses leading
    #    dims only (bitcast, no relayout) and runs a >=4-step pipelined grid.
    x_dense = jax.random.normal(k2, (8, 4, 32, 128), dtype=jnp.bfloat16)
    y_dense = jax.block_until_ready(tofp32(x_dense))
    assert y_dense.dtype == jnp.float32
    assert y_dense.shape == x_dense.shape
    assert bool(jnp.all(y_dense == x_dense.astype(jnp.float32)))

    # 3) 4-byte integer source through the lane-dense path with a ragged final
    #    row block (R=240, tr=56 -> 5 grid steps, last block partial).
    x_int = jax.random.randint(k3, (2, 3, 40, 128), -1000, 1000, dtype=jnp.int32)
    y_int = jax.block_until_ready(tofp32(x_int, force_pallas=True))
    assert y_int.dtype == jnp.float32
    assert y_int.shape == x_int.shape
    assert bool(jnp.all(y_int == x_int.astype(jnp.float32)))

    # 4) Already-float32 input is a pure pass-through.
    assert tofp32(y_small) is y_small

    print("KERNEL_OK")
</pallas_src>

<mosaic_0001>
module attributes {stable_mosaic.version = 11 : i64} {
  func.func @_tofp32_kernel(%arg0: i32, %arg1: memref<8x256xbf16, #tpu.memory_space<vmem>>, %arg2: memref<8x256xf32, #tpu.memory_space<vmem>>) attributes {dimension_semantics = [#tpu.dimension_semantics<parallel>], iteration_bounds = array<i64: 1>, scalar_prefetch = 0 : i64, scratch_operands = 0 : i64, tpu.core_type = #tpu.core_type<tc>, window_params = [{transform_indices = @transform_0, window_bounds = array<i64: 8, 256>}, {transform_indices = @transform_1, window_bounds = array<i64: 8, 256>}]} {
    %c0 = arith.constant 0 : index
    %c0_0 = arith.constant 0 : index
    %0 = vector.load %arg1[%c0, %c0_0] : memref<8x256xbf16, #tpu.memory_space<vmem>>, vector<8x256xbf16>
    %1 = arith.extf %0 : vector<8x256xbf16> to vector<8x256xf32>
    %c0_1 = arith.constant 0 : index
    %c0_2 = arith.constant 0 : index
    %2 = vector.load %arg2[%c0_1, %c0_2] : memref<8x256xf32, #tpu.memory_space<vmem>>, vector<8x256xf32>
    tpu.vector_store %arg2[%c0_1, %c0_2], %1 {strides = array<i32>} : memref<8x256xf32, #tpu.memory_space<vmem>>, vector<8x256xf32>,
    return
  }
  func.func @transform_0(%arg0: i32) -> (i32, i32) {
    %c0_i32 = arith.constant 0 : i32
    %c0_i32_0 = arith.constant 0 : i32
    return %arg0, %c0_i32 : i32, i32
  }
  func.func @transform_1(%arg0: i32) -> (i32, i32) {
    %c0_i32 = arith.constant 0 : i32
    %c0_i32_0 = arith.constant 0 : i32
    return %arg0, %c0_i32 : i32, i32
  }
}

</mosaic_0001>

<llo_original>
// kernel: tpu_custom_call.1
$region0: #{tpu_custom_call.1}
  #allocation0 [shape = 'u32[]', space=smem, size = 0x4, offset = 0x4, fixed_abs, tag = 'smem constant byte address 0x4 - core index']
  #allocation1 [shape = 'u32[72,128]{1,0:T(1,128)}', space=vmem, size = 0x9000, scoped, tag = 'internal scratch']
  %s0 = inlined_call_operand.hbm [shape: bf16[8,256], index: 0, kind: input, shape index: {}]
  %s1 = inlined_call_operand.hbm [shape: f32[8,256], index: 1, kind: output, shape index: {}]
  %s2 = sld [smem:[#allocation0]]
  $region18: #{tpu_custom_call.1} parent=0
    _
  %s4 = ssub.s32 1, %s2
  %s5 = scalar_select 0, %s4, %s2
  $region1: #{tpu_custom_call.1} parent=0
    #allocation2 [shape = 'u8[4096]{0}', space=vmem, size = 0x1000, scoped, tag = 'input window, operand 0, single buffered']
    #allocation3 [shape = 's32[1]{0}', space=sflag, size = 0x4, scoped, tag = 'scoped memory for tpu_custom_call.1']
    #allocation4 [shape = 's32[1]{0}', space=sflag, size = 0x4, scoped, tag = 'scoped memory for tpu_custom_call.1']
    #allocation5 [shape = 'u8[8192]{0}', space=vmem, size = 0x2000, scoped, tag = 'output window, operand 0, single buffered']
    %6 = vsyncpa [#allocation3], 0
    %7 = vsyncpa [#allocation4], 0
    // Predicated region
    $region2: #{tpu_custom_call.1} parent=1 // pred_check
      _
    $region3: #{tpu_custom_call.1} parent=1 // pred_check_branch
      %9 = sbr.rel (0) target = $region5
    $region4: #{tpu_custom_call.1} parent=1 // pred_region
      %11 = vsyncadd [#allocation3], 0
      %s13 = sshll.u32 %s0, 4
      %s14 = int_to_ptr.hbm [resolvable:$true] %s13
      %s15 = sshll.u32 [#allocation2], 4
      %s16 = int_to_ptr.vmem [resolvable:$true] %s15
      %18 = dma.hbm_to_vmem [thread:$0]  %s14, 128, %s16, [#allocation3]
    $region5: #{tpu_custom_call.1} parent=1 // pred_fallthru
      _
    // Predicated region
    $region6: #{tpu_custom_call.1} parent=1 // pred_check
      _
    $region7: #{tpu_custom_call.1} parent=1 // pred_check_branch
      %20 = sbr.rel (0) target = $region9
    $region8: #{tpu_custom_call.1} parent=1 // pred_region
      %22 = dma.done [#allocation3], 128
    $region9: #{tpu_custom_call.1} parent=1 // pred_fallthru
      _
    %v23 = vld [vmem:[#allocation2] sm:$0xff]
    %v24 = vunpack.c.l.bf16 %v23
    %v25 = vunpack.c.h.bf16 %v23
    %26 = vst [vmem:[#allocation5] sm:$0xff] %v24
    %27 = vst [vmem:[#allocation5 + $0x8] sm:$0xff] %v25
    // Predicated region
    $region10: #{tpu_custom_call.1} parent=1 // pred_check
      _
    $region11: #{tpu_custom_call.1} parent=1 // pred_check_branch
      %29 = sbr.rel (0) target = $region13
    $region12: #{tpu_custom_call.1} parent=1 // pred_region
      %31 = vsyncadd [#allocation4], 0
      %s33 = sshll.u32 [#allocation5], 4
      %s34 = int_to_ptr.vmem [resolvable:$true] %s33
      %s35 = sshll.u32 %s1, 4
      %s36 = int_to_ptr.hbm [resolvable:$true] %s35
      %38 = dma.vmem_to_hbm [thread:$0]  %s34, 256, %s36, [#allocation4]
    $region13: #{tpu_custom_call.1} parent=1 // pred_fallthru
      _
    // Predicated region
    $region14: #{tpu_custom_call.1} parent=1 // pred_check
      _
    $region15: #{tpu_custom_call.1} parent=1 // pred_check_branch
      %40 = sbr.rel (0) target = $region17
    $region16: #{tpu_custom_call.1} parent=1 // pred_region
      %42 = dma.done [#allocation4], 256
    $region17: #{tpu_custom_call.1} parent=1 // pred_fallthru
      _
    %43 = vsyncpa [#allocation3], 1
    %44 = vsyncpa [#allocation4], 1

</llo_original>
